<compile_context>
chip_gen: v7x
topology: tpu7x:2x2x1
jax: 0.10.0
libtpu: 0.0.40
codegen_flags: <defaults>
</compile_context>

<pallas_src>
import functools

import jax
import jax.numpy as jnp
from jax.experimental import pallas as pl
from jax.experimental.pallas import tpu as pltpu

LANES = 128


def _tpu_num_cores_and_block_rows():
    """Best-effort, Python-level generation detection (static kernel params)."""
    kind = ""
    try:
        kind = (jax.devices()[0].device_kind or "").lower()
    except Exception:
        pass
    if "v7" in kind:
        return 2, 8192        # 2 TensorCores / chip, 3.2 TB/s HBM -> bigger tiles
    return 1, 4096            # v5e / v6e: 1 TensorCore


def _dice_bce_kernel(x_ref, t_ref, out_ref,
                     acc_bce, acc_inter, acc_den,
                     *, n_total, block_rows, steps_per_core):
    p = pl.program_id(0)   # core axis (CORE_PARALLEL on v7x, size 1 elsewhere)
    i = pl.program_id(1)   # streaming / reduction axis

    @pl.when(i == 0)
    def _init():
        acc_bce[...] = jnp.zeros_like(acc_bce)
        acc_inter[...] = jnp.zeros_like(acc_inter)
        acc_den[...] = jnp.zeros_like(acc_den)

    block_elems = block_rows * LANES
    blk = p * steps_per_core + i          # logical block index (may run past the end)
    block_start = blk * block_elems       # first flat element this block covers

    def _accumulate(masked):
        x = x_ref[...].astype(jnp.float32)
        t = t_ref[...].astype(jnp.float32)

        # One shared exp(-|x|) per element feeds both the stable BCE log-term
        # and the sigmoid:
        #   BCE(x, t)  = max(x, 0) - x*t + log1p(e)        (PyTorch-stable form)
        #   sigmoid(x) = 1/(1+e) if x >= 0 else 1 - 1/(1+e)
        e = jnp.exp(-jnp.abs(x))
        # TODO(synk): on v7x (VALU-bound regime) pl.reciprocal(1+e, approx=True)
        # moves this divide to the EUP, but its ~2^-12 error breaks rtol=1e-5.
        r = 1.0 / (1.0 + e)
        sig = jnp.where(x >= 0, r, 1.0 - r)
        bce = jnp.maximum(x, 0.0) - x * t + jnp.log1p(e)
        inter = sig * t
        den = sig + t                      # merged sum(sigmoid) + sum(tgt) stream

        if masked:
            # Only the single partially-valid block pays for this. where-
            # selection (not multiply-by-mask) so NaN/Inf garbage in the OOB
            # tail cannot leak into the sums.
            rows_iota = jax.lax.broadcasted_iota(jnp.int32, x.shape, 0)
            lanes_iota = jax.lax.broadcasted_iota(jnp.int32, x.shape, 1)
            flat_idx = block_start + rows_iota * LANES + lanes_iota
            valid = flat_idx < n_total
            zero = jnp.zeros_like(x)
            bce = jnp.where(valid, bce, zero)
            inter = jnp.where(valid, inter, zero)
            den = jnp.where(valid, den, zero)

        # Per-step sublane reduction into tiny persistent accumulators: no
        # full-tile accumulator loads/stores; the reduce rides the otherwise
        # idle XLU.
        acc_bce[...] += jnp.sum(bce, axis=0, keepdims=True)
        acc_inter[...] += jnp.sum(inter, axis=0, keepdims=True)
        acc_den[...] += jnp.sum(den, axis=0, keepdims=True)

    fully_valid = block_start + block_elems <= n_total
    partially_valid = jnp.logical_and(block_start < n_total,
                                      block_start + block_elems > n_total)
    pl.when(fully_valid)(lambda: _accumulate(False))
    pl.when(partially_valid)(lambda: _accumulate(True))

    @pl.when(i == pl.num_programs(1) - 1)
    def _finalize():
        # Lane-dense per-core partial rows; the wrapper does the final
        # cross-lane reduce.
        out_ref[0, 0, :] = acc_bce[0, :]     # per-lane sum of per-element BCE
        out_ref[0, 1, :] = acc_inter[0, :]   # per-lane sum of sigmoid(inp)*tgt
        out_ref[0, 2, :] = acc_den[0, :]     # per-lane sum of sigmoid(inp)+tgt


def dice_bce_loss(inp, tgt, *, block_rows=None):
    """Pallas implementation of DiceBCELoss.forward(inp, tgt)."""
    assert inp.shape == tgt.shape
    n_total = int(inp.size)

    num_cores, default_rows = _tpu_num_cores_and_block_rows()
    if block_rows is None:
        block_rows = default_rows

    # Keep native dtype through the DMA; the kernel upcasts per-tile in VMEM.
    x = inp.reshape(-1)
    t = tgt.reshape(-1)

    # Dtype-aware minimal pad so the flat arrays view as lane-dense
    # (rows, 128) slabs whose row count is a multiple of the packed sublane
    # tile (8 for 32-bit, 16 for bf16, 32 for int8/fp8).
    x_item = max(jnp.dtype(x.dtype).itemsize, 1)
    t_item = max(jnp.dtype(t.dtype).itemsize, 1)
    sublane = max(8, 32 // min(x_item, t_item))
    pad = (-n_total) % (sublane * LANES)
    if pad:
        x = jnp.pad(x, (0, pad))
        t = jnp.pad(t, (0, pad))

    rows = (n_total + pad) // LANES        # multiple of `sublane`
    x2d = x.reshape(rows, LANES)
    t2d = t.reshape(rows, LANES)

    block_rows = max(sublane, (int(block_rows) // sublane) * sublane)
    tm = min(block_rows, rows)             # multiple of sublane, or full extent
    total_blocks = pl.cdiv(rows, tm)
    if total_blocks <= 1:
        num_cores = 1                      # nothing to shard
    steps = pl.cdiv(total_blocks, num_cores)

    def idx_map(p, i):
        # Clamp so a core's trailing (empty) steps re-read a valid block; the
        # kernel skips their accumulation via pl.when.
        return (jnp.minimum(p * steps + i, total_blocks - 1), 0)

    kernel = functools.partial(
        _dice_bce_kernel,
        n_total=n_total,
        block_rows=tm,
        steps_per_core=steps,
    )

    if num_cores == 2:
        dim_sems = (getattr(pltpu, "CORE_PARALLEL", "parallel"),
                    getattr(pltpu, "ARBITRARY", "arbitrary"))
    else:
        dim_sems = ("arbitrary", "arbitrary")

    # Double-buffered inputs dominate VMEM now that the accumulators are tiny;
    # add a few MiB of headroom and stay under every generation's physical VMEM.
    in_buf_bytes = 2 * tm * LANES * (x_item + t_item)   # 2 buffers per input
    vmem_limit = int(min(max(in_buf_bytes + (4 << 20), 16 << 20), 48 << 20))

    partials = pl.pallas_call(
        kernel,
        out_shape=jax.ShapeDtypeStruct((num_cores, 3, LANES), jnp.float32),
        grid_spec=pltpu.PrefetchScalarGridSpec(
            num_scalar_prefetch=0,
            grid=(num_cores, steps),
            in_specs=[
                pl.BlockSpec((tm, LANES), idx_map),
                pl.BlockSpec((tm, LANES), idx_map),
            ],
            out_specs=pl.BlockSpec((1, 3, LANES), lambda p, i: (p, 0, 0)),
            scratch_shapes=[pltpu.VMEM((1, LANES), jnp.float32)] * 3,
        ),
        compiler_params=pltpu.CompilerParams(
            dimension_semantics=dim_sems,
            vmem_limit_bytes=vmem_limit,
        ),
    )(x2d, t2d)

    s = jnp.sum(partials, axis=(0, 2))     # (3,): [bce_sum, inter, sum_sig + sum_tgt]
    bce_mean = s[0] / jnp.float32(n_total)
    # Dice smooth constant 1e-6 matches the reference PyTorch module.
    dice_l = 1.0 - (2.0 * s[1] + 1e-6) / (s[2] + 1e-6)
    return bce_mean + dice_l


def _reference(inp, tgt):
    x = inp.astype(jnp.float32)
    t = tgt.astype(jnp.float32)
    sig = jax.nn.sigmoid(x)
    inter = jnp.sum(sig * t)
    dice_l = 1.0 - (2.0 * inter + 1e-6) / (jnp.sum(sig) + jnp.sum(t) + 1e-6)
    bce = jnp.mean(jnp.maximum(x, 0.0) - x * t + jnp.log1p(jnp.exp(-jnp.abs(x))))
    return bce + dice_l


if __name__ == "__main__":
    key = jax.random.PRNGKey(0)
    k1, k2 = jax.random.split(key)
    # NCHW shapes consistent with a segmentation-style UNet output.
    inp = jax.random.normal(k1, (2, 4, 16, 16), dtype=jnp.float32)   # logits
    tgt = jax.random.bernoulli(k2, 0.5, (2, 4, 16, 16)).astype(jnp.float32)

    loss = jax.block_until_ready(dice_bce_loss(inp, tgt))
    ref = jax.block_until_ready(_reference(inp, tgt))
    assert jnp.allclose(loss, ref, rtol=1e-5, atol=1e-5), (loss, ref)
    print("KERNEL_OK")
</pallas_src>

<mosaic_0001>
module attributes {stable_mosaic.version = 11 : i64} {
  func.func @_dice_bce_kernel(%arg0: i32, %arg1: i32, %arg2: memref<16x128xf32, #tpu.memory_space<vmem>>, %arg3: memref<16x128xf32, #tpu.memory_space<vmem>>, %arg4: memref<1x3x128xf32, #tpu.memory_space<vmem>>, %arg5: memref<1x128xf32, #tpu.memory_space<vmem>>, %arg6: memref<1x128xf32, #tpu.memory_space<vmem>>, %arg7: memref<1x128xf32, #tpu.memory_space<vmem>>) attributes {dimension_semantics = [#tpu.dimension_semantics<arbitrary>, #tpu.dimension_semantics<arbitrary>], iteration_bounds = array<i64: 1, 1>, scalar_prefetch = 0 : i64, scratch_operands = 3 : i64, tpu.core_type = #tpu.core_type<tc>, window_params = [{transform_indices = @transform_0, window_bounds = array<i64: 16, 128>}, {transform_indices = @transform_1, window_bounds = array<i64: 16, 128>}, {transform_indices = @transform_2, window_bounds = array<i64: 1, 3, 128>}]} {
    %c0_i32 = arith.constant 0 : i32
    %0 = arith.cmpi eq, %arg1, %c0_i32 : i32
    %1 = arith.extui %0 : i1 to i32
    %c0_i32_0 = arith.constant 0 : i32
    %2 = arith.cmpi ne, %1, %c0_i32_0 : i32
    scf.if %2 {
      %cst = arith.constant 0.000000e+00 : f32
      %19 = vector.broadcast %cst : f32 to vector<1x128xf32>
      %c0 = arith.constant 0 : index
      %c0_10 = arith.constant 0 : index
      %20 = vector.load %arg5[%c0, %c0_10] : memref<1x128xf32, #tpu.memory_space<vmem>>, vector<1x128xf32>
      tpu.vector_store %arg5[%c0, %c0_10], %19 {strides = array<i32>} : memref<1x128xf32, #tpu.memory_space<vmem>>, vector<1x128xf32>,
      %cst_11 = arith.constant 0.000000e+00 : f32
      %21 = vector.broadcast %cst_11 : f32 to vector<1x128xf32>
      %c0_12 = arith.constant 0 : index
      %c0_13 = arith.constant 0 : index
      %22 = vector.load %arg6[%c0_12, %c0_13] : memref<1x128xf32, #tpu.memory_space<vmem>>, vector<1x128xf32>
      tpu.vector_store %arg6[%c0_12, %c0_13], %21 {strides = array<i32>} : memref<1x128xf32, #tpu.memory_space<vmem>>, vector<1x128xf32>,
      %cst_14 = arith.constant 0.000000e+00 : f32
      %23 = vector.broadcast %cst_14 : f32 to vector<1x128xf32>
      %c0_15 = arith.constant 0 : index
      %c0_16 = arith.constant 0 : index
      %24 = vector.load %arg7[%c0_15, %c0_16] : memref<1x128xf32, #tpu.memory_space<vmem>>, vector<1x128xf32>
      tpu.vector_store %arg7[%c0_15, %c0_16], %23 {strides = array<i32>} : memref<1x128xf32, #tpu.memory_space<vmem>>, vector<1x128xf32>,
    } else {
    }
    %c1_i32 = arith.constant 1 : i32
    %3 = arith.muli %arg0, %c1_i32 : i32
    %4 = arith.addi %3, %arg1 : i32
    %c2048_i32 = arith.constant 2048 : i32
    %5 = arith.muli %4, %c2048_i32 : i32
    %c2048_i32_1 = arith.constant 2048 : i32
    %6 = arith.addi %5, %c2048_i32_1 : i32
    %c2048_i32_2 = arith.constant 2048 : i32
    %7 = arith.cmpi sle, %6, %c2048_i32_2 : i32
    %c2048_i32_3 = arith.constant 2048 : i32
    %8 = arith.cmpi slt, %5, %c2048_i32_3 : i32
    %c2048_i32_4 = arith.constant 2048 : i32
    %9 = arith.addi %5, %c2048_i32_4 : i32
    %c2048_i32_5 = arith.constant 2048 : i32
    %10 = arith.cmpi sgt, %9, %c2048_i32_5 : i32
    %11 = arith.andi %8, %10 : i1
    %12 = arith.extui %7 : i1 to i32
    %c0_i32_6 = arith.constant 0 : i32
    %13 = arith.cmpi ne, %12, %c0_i32_6 : i32
    scf.if %13 {
      %c0 = arith.constant 0 : index
      %c0_10 = arith.constant 0 : index
      %19 = vector.load %arg2[%c0, %c0_10] : memref<16x128xf32, #tpu.memory_space<vmem>>, vector<16x128xf32>
      %c0_11 = arith.constant 0 : index
      %c0_12 = arith.constant 0 : index
      %20 = vector.load %arg3[%c0_11, %c0_12] : memref<16x128xf32, #tpu.memory_space<vmem>>, vector<16x128xf32>
      %21 = math.absf %19 : vector<16x128xf32>
      %cst = arith.constant 0.000000e+00 : f32
      %22 = vector.broadcast %cst : f32 to vector<16x128xf32>
      %23 = arith.subf %22, %21 : vector<16x128xf32>
      %24 = math.exp %23 : vector<16x128xf32>
      %cst_13 = arith.constant 1.000000e+00 : f32
      %25 = vector.broadcast %cst_13 : f32 to vector<16x128xf32>
      %26 = arith.addf %25, %24 : vector<16x128xf32>
      %cst_14 = arith.constant 1.000000e+00 : f32
      %27 = vector.broadcast %cst_14 : f32 to vector<16x128xf32>
      %28 = arith.divf %27, %26 : vector<16x128xf32>
      %cst_15 = arith.constant 0.000000e+00 : f32
      %29 = vector.broadcast %cst_15 : f32 to vector<16x128xf32>
      %30 = arith.cmpf oge, %19, %29 : vector<16x128xf32>
      %cst_16 = arith.constant 1.000000e+00 : f32
      %31 = vector.broadcast %cst_16 : f32 to vector<16x128xf32>
      %32 = arith.subf %31, %28 : vector<16x128xf32>
      %33 = arith.select %30, %28, %32 : vector<16x128xi1>, vector<16x128xf32>
      %cst_17 = arith.constant 0.000000e+00 : f32
      %34 = vector.broadcast %cst_17 : f32 to vector<16x128xf32>
      %35 = arith.maximumf %19, %34 : vector<16x128xf32>
      %36 = arith.mulf %19, %20 : vector<16x128xf32>
      %37 = arith.subf %35, %36 : vector<16x128xf32>
      %38 = math.log1p %24 : vector<16x128xf32>
      %39 = arith.addf %37, %38 : vector<16x128xf32>
      %40 = arith.mulf %33, %20 : vector<16x128xf32>
      %41 = arith.addf %33, %20 : vector<16x128xf32>
      %c0_18 = arith.constant 0 : index
      %c0_19 = arith.constant 0 : index
      %42 = vector.load %arg5[%c0_18, %c0_19] : memref<1x128xf32, #tpu.memory_space<vmem>>, vector<1x128xf32>
      %cst_20 = arith.constant dense<0.000000e+00> : vector<128xf32>
      %43 = vector.multi_reduction <add>, %39, %cst_20 [0] : vector<16x128xf32> to vector<128xf32>
      %44 = vector.shape_cast %43 : vector<128xf32> to vector<1x128xf32>
      %45 = arith.addf %42, %44 : vector<1x128xf32>
      %c0_21 = arith.constant 0 : index
      %c0_22 = arith.constant 0 : index
      %46 = vector.load %arg5[%c0_21, %c0_22] : memref<1x128xf32, #tpu.memory_space<vmem>>, vector<1x128xf32>
      tpu.vector_store %arg5[%c0_21, %c0_22], %45 {strides = array<i32>} : memref<1x128xf32, #tpu.memory_space<vmem>>, vector<1x128xf32>,
      %c0_23 = arith.constant 0 : index
      %c0_24 = arith.constant 0 : index
      %47 = vector.load %arg6[%c0_23, %c0_24] : memref<1x128xf32, #tpu.memory_space<vmem>>, vector<1x128xf32>
      %cst_25 = arith.constant dense<0.000000e+00> : vector<128xf32>
      %48 = vector.multi_reduction <add>, %40, %cst_25 [0] : vector<16x128xf32> to vector<128xf32>
      %49 = vector.shape_cast %48 : vector<128xf32> to vector<1x128xf32>
      %50 = arith.addf %47, %49 : vector<1x128xf32>
      %c0_26 = arith.constant 0 : index
      %c0_27 = arith.constant 0 : index
      %51 = vector.load %arg6[%c0_26, %c0_27] : memref<1x128xf32, #tpu.memory_space<vmem>>, vector<1x128xf32>
      tpu.vector_store %arg6[%c0_26, %c0_27], %50 {strides = array<i32>} : memref<1x128xf32, #tpu.memory_space<vmem>>, vector<1x128xf32>,
      %c0_28 = arith.constant 0 : index
      %c0_29 = arith.constant 0 : index
      %52 = vector.load %arg7[%c0_28, %c0_29] : memref<1x128xf32, #tpu.memory_space<vmem>>, vector<1x128xf32>
      %cst_30 = arith.constant dense<0.000000e+00> : vector<128xf32>
      %53 = vector.multi_reduction <add>, %41, %cst_30 [0] : vector<16x128xf32> to vector<128xf32>
      %54 = vector.shape_cast %53 : vector<128xf32> to vector<1x128xf32>
      %55 = arith.addf %52, %54 : vector<1x128xf32>
      %c0_31 = arith.constant 0 : index
      %c0_32 = arith.constant 0 : index
      %56 = vector.load %arg7[%c0_31, %c0_32] : memref<1x128xf32, #tpu.memory_space<vmem>>, vector<1x128xf32>
      tpu.vector_store %arg7[%c0_31, %c0_32], %55 {strides = array<i32>} : memref<1x128xf32, #tpu.memory_space<vmem>>, vector<1x128xf32>,
    } else {
    }
    %14 = arith.extui %11 : i1 to i32
    %c0_i32_7 = arith.constant 0 : i32
    %15 = arith.cmpi ne, %14, %c0_i32_7 : i32
    scf.if %15 {
      %c0 = arith.constant 0 : index
      %c0_10 = arith.constant 0 : index
      %19 = vector.load %arg2[%c0, %c0_10] : memref<16x128xf32, #tpu.memory_space<vmem>>, vector<16x128xf32>
      %c0_11 = arith.constant 0 : index
      %c0_12 = arith.constant 0 : index
      %20 = vector.load %arg3[%c0_11, %c0_12] : memref<16x128xf32, #tpu.memory_space<vmem>>, vector<16x128xf32>
      %21 = math.absf %19 : vector<16x128xf32>
      %cst = arith.constant 0.000000e+00 : f32
      %22 = vector.broadcast %cst : f32 to vector<16x128xf32>
      %23 = arith.subf %22, %21 : vector<16x128xf32>
      %24 = math.exp %23 : vector<16x128xf32>
      %cst_13 = arith.constant 1.000000e+00 : f32
      %25 = vector.broadcast %cst_13 : f32 to vector<16x128xf32>
      %26 = arith.addf %25, %24 : vector<16x128xf32>
      %cst_14 = arith.constant 1.000000e+00 : f32
      %27 = vector.broadcast %cst_14 : f32 to vector<16x128xf32>
      %28 = arith.divf %27, %26 : vector<16x128xf32>
      %cst_15 = arith.constant 0.000000e+00 : f32
      %29 = vector.broadcast %cst_15 : f32 to vector<16x128xf32>
      %30 = arith.cmpf oge, %19, %29 : vector<16x128xf32>
      %cst_16 = arith.constant 1.000000e+00 : f32
      %31 = vector.broadcast %cst_16 : f32 to vector<16x128xf32>
      %32 = arith.subf %31, %28 : vector<16x128xf32>
      %33 = arith.select %30, %28, %32 : vector<16x128xi1>, vector<16x128xf32>
      %cst_17 = arith.constant 0.000000e+00 : f32
      %34 = vector.broadcast %cst_17 : f32 to vector<16x128xf32>
      %35 = arith.maximumf %19, %34 : vector<16x128xf32>
      %36 = arith.mulf %19, %20 : vector<16x128xf32>
      %37 = arith.subf %35, %36 : vector<16x128xf32>
      %38 = math.log1p %24 : vector<16x128xf32>
      %39 = arith.addf %37, %38 : vector<16x128xf32>
      %40 = arith.mulf %33, %20 : vector<16x128xf32>
      %41 = arith.addf %33, %20 : vector<16x128xf32>
      %42 = tpu.iota {dimensions = array<i32: 0>} : vector<16x128xi32>
      %43 = tpu.iota {dimensions = array<i32: 1>} : vector<16x128xi32>
      %c128_i32 = arith.constant 128 : i32
      %44 = vector.broadcast %c128_i32 : i32 to vector<16x128xi32>
      %45 = arith.muli %42, %44 : vector<16x128xi32>
      %46 = vector.broadcast %5 : i32 to vector<16x128xi32>
      %47 = arith.addi %46, %45 : vector<16x128xi32>
      %48 = arith.addi %47, %43 : vector<16x128xi32>
      %c2048_i32_18 = arith.constant 2048 : i32
      %49 = vector.broadcast %c2048_i32_18 : i32 to vector<16x128xi32>
      %50 = arith.cmpi slt, %48, %49 : vector<16x128xi32>
      %cst_19 = arith.constant 0.000000e+00 : f32
      %51 = vector.broadcast %cst_19 : f32 to vector<16x128xf32>
      %52 = arith.select %50, %39, %51 : vector<16x128xi1>, vector<16x128xf32>
      %53 = arith.select %50, %40, %51 : vector<16x128xi1>, vector<16x128xf32>
      %54 = arith.select %50, %41, %51 : vector<16x128xi1>, vector<16x128xf32>
      %c0_20 = arith.constant 0 : index
      %c0_21 = arith.constant 0 : index
      %55 = vector.load %arg5[%c0_20, %c0_21] : memref<1x128xf32, #tpu.memory_space<vmem>>, vector<1x128xf32>
      %cst_22 = arith.constant dense<0.000000e+00> : vector<128xf32>
      %56 = vector.multi_reduction <add>, %52, %cst_22 [0] : vector<16x128xf32> to vector<128xf32>
      %57 = vector.shape_cast %56 : vector<128xf32> to vector<1x128xf32>
      %58 = arith.addf %55, %57 : vector<1x128xf32>
      %c0_23 = arith.constant 0 : index
      %c0_24 = arith.constant 0 : index
      %59 = vector.load %arg5[%c0_23, %c0_24] : memref<1x128xf32, #tpu.memory_space<vmem>>, vector<1x128xf32>
      tpu.vector_store %arg5[%c0_23, %c0_24], %58 {strides = array<i32>} : memref<1x128xf32, #tpu.memory_space<vmem>>, vector<1x128xf32>,
      %c0_25 = arith.constant 0 : index
      %c0_26 = arith.constant 0 : index
      %60 = vector.load %arg6[%c0_25, %c0_26] : memref<1x128xf32, #tpu.memory_space<vmem>>, vector<1x128xf32>
      %cst_27 = arith.constant dense<0.000000e+00> : vector<128xf32>
      %61 = vector.multi_reduction <add>, %53, %cst_27 [0] : vector<16x128xf32> to vector<128xf32>
      %62 = vector.shape_cast %61 : vector<128xf32> to vector<1x128xf32>
      %63 = arith.addf %60, %62 : vector<1x128xf32>
      %c0_28 = arith.constant 0 : index
      %c0_29 = arith.constant 0 : index
      %64 = vector.load %arg6[%c0_28, %c0_29] : memref<1x128xf32, #tpu.memory_space<vmem>>, vector<1x128xf32>
      tpu.vector_store %arg6[%c0_28, %c0_29], %63 {strides = array<i32>} : memref<1x128xf32, #tpu.memory_space<vmem>>, vector<1x128xf32>,
      %c0_30 = arith.constant 0 : index
      %c0_31 = arith.constant 0 : index
      %65 = vector.load %arg7[%c0_30, %c0_31] : memref<1x128xf32, #tpu.memory_space<vmem>>, vector<1x128xf32>
      %cst_32 = arith.constant dense<0.000000e+00> : vector<128xf32>
      %66 = vector.multi_reduction <add>, %54, %cst_32 [0] : vector<16x128xf32> to vector<128xf32>
      %67 = vector.shape_cast %66 : vector<128xf32> to vector<1x128xf32>
      %68 = arith.addf %65, %67 : vector<1x128xf32>
      %c0_33 = arith.constant 0 : index
      %c0_34 = arith.constant 0 : index
      %69 = vector.load %arg7[%c0_33, %c0_34] : memref<1x128xf32, #tpu.memory_space<vmem>>, vector<1x128xf32>
      tpu.vector_store %arg7[%c0_33, %c0_34], %68 {strides = array<i32>} : memref<1x128xf32, #tpu.memory_space<vmem>>, vector<1x128xf32>,
    } else {
    }
    %c0_i32_8 = arith.constant 0 : i32
    %16 = arith.cmpi eq, %arg1, %c0_i32_8 : i32
    %17 = arith.extui %16 : i1 to i32
    %c0_i32_9 = arith.constant 0 : i32
    %18 = arith.cmpi ne, %17, %c0_i32_9 : i32
    scf.if %18 {
      %c0 = arith.constant 0 : index
      %c0_10 = arith.constant 0 : index
      %19 = vector.load %arg5[%c0, %c0_10] : memref<1x128xf32, #tpu.memory_space<vmem>>, vector<1x128xf32>
      %20 = vector.shape_cast %19 : vector<1x128xf32> to vector<128xf32>
      %c0_11 = arith.constant 0 : index
      %c0_12 = arith.constant 0 : index
      %c0_13 = arith.constant 0 : index
      %21 = vector.load %arg4[%c0_11, %c0_12, %c0_13] : memref<1x3x128xf32, #tpu.memory_space<vmem>>, vector<1x1x128xf32>
      %22 = vector.shape_cast %21 : vector<1x1x128xf32> to vector<128xf32>
      %23 = vector.shape_cast %20 : vector<128xf32> to vector<1x1x128xf32>
      tpu.vector_store %arg4[%c0_11, %c0_12, %c0_13], %23 {strides = array<i32>} : memref<1x3x128xf32, #tpu.memory_space<vmem>>, vector<1x1x128xf32>,
      %c0_14 = arith.constant 0 : index
      %c0_15 = arith.constant 0 : index
      %24 = vector.load %arg6[%c0_14, %c0_15] : memref<1x128xf32, #tpu.memory_space<vmem>>, vector<1x128xf32>
      %25 = vector.shape_cast %24 : vector<1x128xf32> to vector<128xf32>
      %c0_16 = arith.constant 0 : index
      %c1 = arith.constant 1 : index
      %c0_17 = arith.constant 0 : index
      %26 = vector.load %arg4[%c0_16, %c1, %c0_17] : memref<1x3x128xf32, #tpu.memory_space<vmem>>, vector<1x1x128xf32>
      %27 = vector.shape_cast %26 : vector<1x1x128xf32> to vector<128xf32>
      %28 = vector.shape_cast %25 : vector<128xf32> to vector<1x1x128xf32>
      tpu.vector_store %arg4[%c0_16, %c1, %c0_17], %28 {strides = array<i32>} : memref<1x3x128xf32, #tpu.memory_space<vmem>>, vector<1x1x128xf32>,
      %c0_18 = arith.constant 0 : index
      %c0_19 = arith.constant 0 : index
      %29 = vector.load %arg7[%c0_18, %c0_19] : memref<1x128xf32, #tpu.memory_space<vmem>>, vector<1x128xf32>
      %30 = vector.shape_cast %29 : vector<1x128xf32> to vector<128xf32>
      %c0_20 = arith.constant 0 : index
      %c2 = arith.constant 2 : index
      %c0_21 = arith.constant 0 : index
      %31 = vector.load %arg4[%c0_20, %c2, %c0_21] : memref<1x3x128xf32, #tpu.memory_space<vmem>>, vector<1x1x128xf32>
      %32 = vector.shape_cast %31 : vector<1x1x128xf32> to vector<128xf32>
      %33 = vector.shape_cast %30 : vector<128xf32> to vector<1x1x128xf32>
      tpu.vector_store %arg4[%c0_20, %c2, %c0_21], %33 {strides = array<i32>} : memref<1x3x128xf32, #tpu.memory_space<vmem>>, vector<1x1x128xf32>,
    } else {
    }
    return
  }
  func.func @transform_0(%arg0: i32, %arg1: i32) -> (i32, i32) {
    %c1_i32 = arith.constant 1 : i32
    %0 = arith.muli %arg0, %c1_i32 : i32
    %1 = arith.addi %0, %arg1 : i32
    %c0_i32 = arith.constant 0 : i32
    %2 = arith.minsi %1, %c0_i32 : i32
    %c0_i32_0 = arith.constant 0 : i32
    %c0_i32_1 = arith.constant 0 : i32
    return %2, %c0_i32_0 : i32, i32
  }
  func.func @transform_1(%arg0: i32, %arg1: i32) -> (i32, i32) {
    %c1_i32 = arith.constant 1 : i32
    %0 = arith.muli %arg0, %c1_i32 : i32
    %1 = arith.addi %0, %arg1 : i32
    %c0_i32 = arith.constant 0 : i32
    %2 = arith.minsi %1, %c0_i32 : i32
    %c0_i32_0 = arith.constant 0 : i32
    %c0_i32_1 = arith.constant 0 : i32
    return %2, %c0_i32_0 : i32, i32
  }
  func.func @transform_2(%arg0: i32, %arg1: i32) -> (i32, i32, i32) {
    %c0_i32 = arith.constant 0 : i32
    %c0_i32_0 = arith.constant 0 : i32
    %c0_i32_1 = arith.constant 0 : i32
    return %arg0, %c0_i32, %c0_i32_0 : i32, i32, i32
  }
}

</mosaic_0001>

<llo_original>
// kernel: tpu_custom_call.1
$region0: #{tpu_custom_call.1}
  #allocation0 [shape = 'u32[]', space=smem, size = 0x4, offset = 0x4, fixed_abs, tag = 'smem constant byte address 0x4 - core index']
  #allocation1 [shape = 'u32[144,128]{1,0:T(1,128)}', space=vmem, size = 0x12000, scoped, tag = 'internal scratch']
  #allocation2 [shape = 'f32[1,128]{1,0:T(1,128)}', space=vmem, size = 0x200, scoped, tag = 'scratch operand']
  #allocation3 [shape = 'f32[1,128]{1,0:T(1,128)}', space=vmem, size = 0x200, scoped, tag = 'scratch operand']
  #allocation4 [shape = 'f32[1,128]{1,0:T(1,128)}', space=vmem, size = 0x200, scoped, tag = 'scratch operand']
  %s0 = inlined_call_operand.hbm [shape: f32[16,128], index: 0, kind: input, shape index: {}]
  %s1 = inlined_call_operand.hbm [shape: f32[16,128], index: 1, kind: input, shape index: {}]
  %s2 = inlined_call_operand.vmem [shape: f32[1,3,128], index: 2, kind: output, shape index: {}]
  %s3 = sld [smem:[#allocation0]]
  $region42: #{tpu_custom_call.1} parent=0
    _
  %s5 = ssub.s32 1, %s3
  %s6 = scalar_select 0, %s5, %s3
  $region1: #{tpu_custom_call.1} parent=0
    #allocation5 [shape = 'u8[8192]{0}', space=vmem, size = 0x2000, scoped, tag = 'input window, operand 0, single buffered']
    #allocation6 [shape = 's32[1]{0}', space=sflag, size = 0x4, scoped, tag = 'scoped memory for tpu_custom_call.1']
    #allocation7 [shape = 'u8[8192]{0}', space=vmem, size = 0x2000, scoped, tag = 'input window, operand 1, single buffered']
    #allocation8 [shape = 's32[1]{0}', space=sflag, size = 0x4, scoped, tag = 'scoped memory for tpu_custom_call.1']
    %7 = vsyncpa [#allocation6], 0
    %8 = vsyncpa [#allocation8], 0
    // Predicated region
    $region2: #{tpu_custom_call.1} parent=1 // pred_check
      _
    $region3: #{tpu_custom_call.1} parent=1 // pred_check_branch
      %10 = sbr.rel (0) target = $region5
    $region4: #{tpu_custom_call.1} parent=1 // pred_region
      %s11 = sadd.s32 0, 0
      %p12 = scmp.lt.s32.totalorder %s11, 0
      %s13 = scalar_select %p12, %s11, 0
      %s14 = smul.u32 2, %s13
      %s16 = ssub.s32 256, 256
      %17 = vsyncadd [#allocation6], %s16
      %s18 = smul.addr %s14, 128
      %s19 = scalar_lea.hbm %s0, %s18
      %s20 = sshll.u32 [#allocation5], 4
      %s21 = int_to_ptr.vmem [resolvable:$true] %s20
      %26 = dma.hbm_to_vmem [thread:$0]  %s19, 256, %s21, [#allocation6], 128, 128, 8
    $region5: #{tpu_custom_call.1} parent=1 // pred_fallthru
      _
    // Predicated region
    $region6: #{tpu_custom_call.1} parent=1 // pred_check
      _
    $region7: #{tpu_custom_call.1} parent=1 // pred_check_branch
      %28 = sbr.rel (0) target = $region9
    $region8: #{tpu_custom_call.1} parent=1 // pred_region
      %s29 = sadd.s32 0, 0
      %p30 = scmp.lt.s32.totalorder %s29, 0
      %s31 = scalar_select %p30, %s29, 0
      %s32 = smul.u32 2, %s31
      %s34 = ssub.s32 256, 256
      %35 = vsyncadd [#allocation8], %s34
      %s36 = smul.addr %s32, 128
      %s37 = scalar_lea.hbm %s1, %s36
      %s38 = sshll.u32 [#allocation7], 4
      %s39 = int_to_ptr.vmem [resolvable:$true] %s38
      %44 = dma.hbm_to_vmem [thread:$0]  %s37, 256, %s39, [#allocation8], 128, 128, 8
    $region9: #{tpu_custom_call.1} parent=1 // pred_fallthru
      _
    // Predicated region
    $region10: #{tpu_custom_call.1} parent=1 // pred_check
      _
    $region11: #{tpu_custom_call.1} parent=1 // pred_check_branch
      %46 = sbr.rel (0) target = $region13
    $region12: #{tpu_custom_call.1} parent=1 // pred_region
      %47 = dma.done [#allocation6], 256
    $region13: #{tpu_custom_call.1} parent=1 // pred_fallthru
      _
    // Predicated region
    $region14: #{tpu_custom_call.1} parent=1 // pred_check
      _
    $region15: #{tpu_custom_call.1} parent=1 // pred_check_branch
      %49 = sbr.rel (0) target = $region17
    $region16: #{tpu_custom_call.1} parent=1 // pred_region
      %50 = dma.done [#allocation8], 256
    $region17: #{tpu_custom_call.1} parent=1 // pred_fallthru
      _
    %s51 = sadd.s32 0, 0
    %p52 = scmp.lt.s32.totalorder %s51, 0
    %s53 = scalar_select %p52, %s51, 0
    %s54 = smul.u32 2, %s53
    %s55 = sadd.s32 0, 0
    %p56 = scmp.lt.s32.totalorder %s55, 0
    %s57 = scalar_select %p56, %s55, 0
    %s58 = smul.u32 2, %s57
    %p59 = scmp.eq.s32.totalorder 0, 0
    // Predicated region
    $region18: #{tpu_custom_call.1} parent=1 // pred_check
      %p60 = pneg %p59
    $region19: #{tpu_custom_call.1} parent=1 // pred_check_branch
      %62 = sbr.rel (%p60) target = $region21
    $region20: #{tpu_custom_call.1} parent=1 // pred_region
      %63 = vst [vmem:[#allocation2] sm:$0x1] 0.0
      %64 = vst [vmem:[#allocation3] sm:$0x1] 0.0
      %65 = vst [vmem:[#allocation4] sm:$0x1] 0.0
    $region21: #{tpu_custom_call.1} parent=1 // pred_fallthru
      _
    %s66 = sadd.s32 0, 0
    %s67 = smul.u32 %s66, 2048
    %s68 = sadd.s32 %s67, 2048
    %p69 = scmp.le.s32.totalorder %s68, 2048
    %p70 = scmp.lt.s32.totalorder %s67, 2048
    %p71 = scmp.gt.s32.totalorder %s68, 2048
    %p72 = pnand %p70, %p71
    %p73 = pneg %p72
    // Predicated region
    $region22: #{tpu_custom_call.1} parent=1 // pred_check
      %p74 = pneg %p69
    $region23: #{tpu_custom_call.1} parent=1 // pred_check_branch
      %76 = sbr.rel (%p74) target = $region25
    $region24: #{tpu_custom_call.1} parent=1 // pred_region
      %v77 = vld [vmem:[#allocation5] sm:$0xff]
      %v78 = vld [vmem:[#allocation5 + $0x8] sm:$0xff]
      %v79 = vld [vmem:[#allocation7] sm:$0xff]
      %v80 = vld [vmem:[#allocation7 + $0x8] sm:$0xff]
      %v81 = vand.u32 2147483647, %v77
      %v82 = vand.u32 2147483647, %v78
      %v83 = vsub.f32 0.0, %v81
      %v84 = vsub.f32 0.0, %v82
      %v85 = vmul.f32 %v83, 1.442695
      %v86 = vpow.pop %v85
      %v87 = vmul.f32 %v84, 1.442695
      %v88 = vpow.pop %v87
      %v89 = vadd.f32 %v86, 1.0
      %v90 = vadd.f32 %v88, 1.0
      %v91 = vrcp.pop %v89
      %v92 = vmul.f32 1.0, %v91
      %v93 = vrcp.pop %v90
      %v94 = vmul.f32 1.0, %v93
      %vm95 = vcmp.ge.f32.partialorder %v77, 0.0
      %vm96 = vcmp.ge.f32.partialorder %v78, 0.0
      %v97 = vsub.f32 1.0, %v92
      %v98 = vsub.f32 1.0, %v94
      %v99 = vsel %vm95, %v92, %v97
      %v100 = vsel %vm96, %v94, %v98
      %v101 = vmax.f32 %v77, 0.0
      %v102 = vmax.f32 %v78, 0.0
      %v103 = vmul.f32 %v77, %v79
      %v104 = vmul.f32 %v78, %v80
      %v105 = vsub.f32 %v101, %v103
      %v106 = vsub.f32 %v102, %v104
      %v107 = vadd.f32 %v86, 1.0
      %v108 = vlog2.pop %v107
      %v109 = vmul.f32 %v108, 0.6931472
      %v110 = vmul.f32 -0.5, %v86
      %v111 = vadd.f32 %v110, 1.0
      %v112 = vmul.f32 %v111, %v86
      %v113 = vand.u32 2147483647, %v86
      %vm114 = vcmp.lt.f32.partialorder %v113, 0.0004427343
      %v115 = vsel %vm114, %v112, %v109
      %v116 = vadd.f32 %v88, 1.0
      %v117 = vlog2.pop %v116
      %v118 = vmul.f32 %v117, 0.6931472
      %v119 = vmul.f32 -0.5, %v88
      %v120 = vadd.f32 %v119, 1.0
      %v121 = vmul.f32 %v120, %v88
      %v122 = vand.u32 2147483647, %v88
      %vm123 = vcmp.lt.f32.partialorder %v122, 0.0004427343
      %v124 = vsel %vm123, %v121, %v118
      %v125 = vadd.f32 %v105, %v115
      %v126 = vadd.f32 %v106, %v124
      %v127 = vmul.f32 %v99, %v79
      %v128 = vmul.f32 %v100, %v80
      %v129 = vadd.f32 %v99, %v79
      %v130 = vadd.f32 %v100, %v80
      %v131 = vld [vmem:[#allocation2] sm:$0x1]
      %v132 = vadd.f32 %v125, %v126
      %v133 = vrot.slane %v132, 4
      %v134 = vadd.f32 %v132, %v133
      %v135 = vrot.slane %v134, 2
      %v136 = vadd.f32 %v134, %v135
      %v137 = vrot.slane %v136, 1
      %v138 = vadd.f32 %v136, %v137
      %v139 = vadd.f32 %v131, %v138
      %140 = vst [vmem:[#allocation2] sm:$0x1] %v139
      %v141 = vld [vmem:[#allocation3] sm:$0x1]
      %v142 = vadd.f32 %v127, %v128
      %v143 = vrot.slane %v142, 4
      %v144 = vadd.f32 %v142, %v143
      %v145 = vrot.slane %v144, 2
      %v146 = vadd.f32 %v144, %v145
      %v147 = vrot.slane %v146, 1
      %v148 = vadd.f32 %v146, %v147
      %v149 = vadd.f32 %v141, %v148
      %150 = vst [vmem:[#allocation3] sm:$0x1] %v149
      %v151 = vld [vmem:[#allocation4] sm:$0x1]
      %v152 = vadd.f32 %v129, %v130
      %v153 = vrot.slane %v152, 4
      %v154 = vadd.f32 %v152, %v153
      %v155 = vrot.slane %v154, 2
      %v156 = vadd.f32 %v154, %v155
      %v157 = vrot.slane %v156, 1
      %v158 = vadd.f32 %v156, %v157
      %v159 = vadd.f32 %v151, %v158
      %160 = vst [vmem:[#allocation4] sm:$0x1] %v159
    $region25: #{tpu_custom_call.1} parent=1 // pred_fallthru
      _
    // Predicated region
    $region26: #{tpu_custom_call.1} parent=1 // pred_check
      _
    $region27: #{tpu_custom_call.1} parent=1 // pred_check_branch
      %162 = sbr.rel (%p72) target = $region29
    $region28: #{tpu_custom_call.1} parent=1 // pred_region
      %v163 = vld [vmem:[#allocation5] sm:$0xff]
      %v164 = vld [vmem:[#allocation5 + $0x8] sm:$0xff]
      %v165 = vld [vmem:[#allocation7] sm:$0xff]
      %v166 = vld [vmem:[#allocation7 + $0x8] sm:$0xff]
      %v167 = vand.u32 2147483647, %v163
      %v168 = vand.u32 2147483647, %v164
      %v169 = vsub.f32 0.0, %v167
      %v170 = vsub.f32 0.0, %v168
      %v171 = vmul.f32 %v169, 1.442695
      %v172 = vpow.pop %v171
      %v173 = vmul.f32 %v170, 1.442695
      %v174 = vpow.pop %v173
      %v175 = vadd.f32 %v172, 1.0
      %v176 = vadd.f32 %v174, 1.0
      %v177 = vrcp.pop %v175
      %v178 = vmul.f32 1.0, %v177
      %v179 = vrcp.pop %v176
      %v180 = vmul.f32 1.0, %v179
      %vm181 = vcmp.ge.f32.partialorder %v163, 0.0
      %vm182 = vcmp.ge.f32.partialorder %v164, 0.0
      %v183 = vsub.f32 1.0, %v178
      %v184 = vsub.f32 1.0, %v180
      %v185 = vsel %vm181, %v178, %v183
      %v186 = vsel %vm182, %v180, %v184
      %v187 = vmax.f32 %v163, 0.0
      %v188 = vmax.f32 %v164, 0.0
      %v189 = vmul.f32 %v163, %v165
      %v190 = vmul.f32 %v164, %v166
      %v191 = vsub.f32 %v187, %v189
      %v192 = vsub.f32 %v188, %v190
      %v193 = vadd.f32 %v172, 1.0
      %v194 = vlog2.pop %v193
      %v195 = vmul.f32 %v194, 0.6931472
      %v196 = vmul.f32 -0.5, %v172
      %v197 = vadd.f32 %v196, 1.0
      %v198 = vmul.f32 %v197, %v172
      %v199 = vand.u32 2147483647, %v172
      %vm200 = vcmp.lt.f32.partialorder %v199, 0.0004427343
      %v201 = vsel %vm200, %v198, %v195
      %v202 = vadd.f32 %v174, 1.0
      %v203 = vlog2.pop %v202
      %v204 = vmul.f32 %v203, 0.6931472
      %v205 = vmul.f32 -0.5, %v174
      %v206 = vadd.f32 %v205, 1.0
      %v207 = vmul.f32 %v206, %v174
      %v208 = vand.u32 2147483647, %v174
      %vm209 = vcmp.lt.f32.partialorder %v208, 0.0004427343
      %v210 = vsel %vm209, %v207, %v204
      %v211 = vadd.f32 %v191, %v201
      %v212 = vadd.f32 %v192, %v210
      %v213 = vmul.f32 %v185, %v165
      %v214 = vmul.f32 %v186, %v166
      %v215 = vadd.f32 %v185, %v165
      %v216 = vadd.f32 %v186, %v166
      %v217 = vlaneseq
      %v218 = vshrl.u32 %v217, 7
      %v219 = vadd.s32 %v218, 8
      %v220 = vlaneseq
      %v221 = vand.u32 %v220, 127
      %v222 = vmul.u32 %v218, 128
      %v223 = vmul.u32 %v219, 128
      %v224 = vstv %s67
      %v225 = vadd.s32 %v224, %v222
      %v226 = vadd.s32 %v224, %v223
      %v227 = vadd.s32 %v225, %v221
      %v228 = vadd.s32 %v226, %v221
      %vm229 = vcmp.lt.s32.totalorder %v227, 2048
      %vm230 = vcmp.lt.s32.totalorder %v228, 2048
      %v231 = vsel %vm229, %v211, 0.0
      %v232 = vsel %vm230, %v212, 0.0
      %v233 = vsel %vm229, %v213, 0.0
      %v234 = vsel %vm230, %v214, 0.0
      %v235 = vsel %vm229, %v215, 0.0
      %v236 = vsel %vm230, %v216, 0.0
      %v237 = vld [vmem:[#allocation2] sm:$0x1]
      %v238 = vadd.f32 %v231, %v232
      %v239 = vrot.slane %v238, 4
      %v240 = vadd.f32 %v238, %v239
      %v241 = vrot.slane %v240, 2
      %v242 = vadd.f32 %v240, %v241
      %v243 = vrot.slane %v242, 1
      %v244 = vadd.f32 %v242, %v243
      %v245 = vadd.f32 %v237, %v244
      %246 = vst [vmem:[#allocation2] sm:$0x1] %v245
      %v247 = vld [vmem:[#allocation3] sm:$0x1]
      %v248 = vadd.f32 %v233, %v234
      %v249 = vrot.slane %v248, 4
      %v250 = vadd.f32 %v248, %v249
      %v251 = vrot.slane %v250, 2
      %v252 = vadd.f32 %v250, %v251
      %v253 = vrot.slane %v252, 1
      %v254 = vadd.f32 %v252, %v253
      %v255 = vadd.f32 %v247, %v254
      %256 = vst [vmem:[#allocation3] sm:$0x1] %v255
      %v257 = vld [vmem:[#allocation4] sm:$0x1]
      %v258 = vadd.f32 %v235, %v236
      %v259 = vrot.slane %v258, 4
      %v260 = vadd.f32 %v258, %v259
      %v261 = vrot.slane %v260, 2
      %v262 = vadd.f32 %v260, %v261
      %v263 = vrot.slane %v262, 1
      %v264 = vadd.f32 %v262, %v263
      %v265 = vadd.f32 %v257, %v264
      %266 = vst [vmem:[#allocation4] sm:$0x1] %v265
    $region29: #{tpu_custom_call.1} parent=1 // pred_fallthru
      _
    // Predicated region
    $region30: #{tpu_custom_call.1} parent=1 // pred_check
      %p267 = pneg %p59
    $region31: #{tpu_custom_call.1} parent=1 // pred_check_branch
      %269 = sbr.rel (%p267) target = $region33
    $region32: #{tpu_custom_call.1} parent=1 // pred_region
      %v270 = vld [vmem:[#allocation2] sm:$0x1]
      %271 = vst [vmem:[%s2] sm:$0x1] %v270
      %v272 = vld [vmem:[#allocation3] sm:$0x1]
      %273 = vst [vmem:[%s2 + $0x1] sm:$0x1] %v272
      %v274 = vld [vmem:[#allocation4] sm:$0x1]
      %275 = vst [vmem:[%s2 + $0x2] sm:$0x1] %v274
    $region33: #{tpu_custom_call.1} parent=1 // pred_fallthru
      _
    // Predicated region
    $region34: #{tpu_custom_call.1} parent=1 // pred_check
      _
    $region35: #{tpu_custom_call.1} parent=1 // pred_check_branch
      %277 = sbr.rel (0) target = $region37
    $region36: #{tpu_custom_call.1} parent=1 // pred_region
      _
    $region37: #{tpu_custom_call.1} parent=1 // pred_fallthru
      _
    // Predicated region
    $region38: #{tpu_custom_call.1} parent=1 // pred_check
      _
    $region39: #{tpu_custom_call.1} parent=1 // pred_check_branch
      %279 = sbr.rel (0) target = $region41
    $region40: #{tpu_custom_call.1} parent=1 // pred_region
      _
    $region41: #{tpu_custom_call.1} parent=1 // pred_fallthru
      _
    %280 = vsyncpa [#allocation6], 1
    %281 = vsyncpa [#allocation8], 1

</llo_original>
